<compile_context>
chip_gen: v6e
topology: v6e:2x2x1
jax: 0.10.0
libtpu: 0.0.40
codegen_flags: <defaults>
</compile_context>

<pallas_src>
import jax
import jax.numpy as jnp
from jax.experimental import pallas as pl
from jax.experimental.pallas import tpu as pltpu


# ------------------------------- helpers -----------------------------------

def _round_up(x, m):
    return (x + m - 1) // m * m


def _tpu_vmem_bytes():
    """Physical VMEM per TensorCore (best effort, generation aware)."""
    try:
        info = pltpu.get_tpu_info()
        cap = getattr(info, "vmem_capacity_bytes", None)
        if cap:
            return int(cap)
    except Exception:
        pass
    try:
        kind = jax.devices()[0].device_kind.lower()
    except Exception:
        kind = ""
    if "v7" in kind or "7x" in kind:
        return 64 * 1024 * 1024
    return 128 * 1024 * 1024        # v5e / v6e


def _is_v7x():
    try:
        kind = jax.devices()[0].device_kind.lower()
    except Exception:
        return False
    return "v7" in kind or "7x" in kind


def _choose_tm(n):
    if n >= 1024:
        return 512
    if n >= 256:
        return 256
    if n >= 128:
        return 128
    return _round_up(max(n, 1), 16)     # bf16 sublane packing wants >=16 rows


def _plan_tiles(n, h_in_p, h_out_p, out_bytes, budget):
    """Return (tm, tk, tn). h_in_p / h_out_p are already multiples of 128."""
    tm = _choose_tm(n)
    while True:
        # (a) weight-resident: whole [H_in, H_out] bf16 weight stays in VMEM
        # with a constant index_map -> DMA'd once, reused by every row tile.
        # (x2 on the weight conservatively accounts for Pallas buffering.)
        resident = (4 * h_in_p * h_out_p
                    + 2 * tm * h_in_p * 4          # x tiles (f32), double-buffered
                    + 2 * tm * h_out_p * out_bytes  # out tiles, double-buffered
                    + 8 * h_out_p * 4)             # bias
        if resident <= budget:
            return tm, h_in_p, h_out_p
        # (b) streamed weight: largest N/K tiles that fit.
        for tn in (2048, 1024, 512, 256, 128):
            if h_out_p % tn:
                continue
            for tk in (2048, 1024, 512, 256, 128):
                if h_in_p % tk:
                    continue
                need = (2 * tm * tk * 4            # x (f32)
                        + 2 * tk * tn * 2          # W (bf16)
                        + 2 * tm * tn * out_bytes  # out
                        + tm * tn * 4              # acc (worst case)
                        + 8 * tn * 4)              # bias
                if need <= budget:
                    return tm, tk, tn
        if tm <= 16:
            return tm, 128, 128
        tm = max(16, tm // 2)


# ----------------------------- Pallas kernels -------------------------------

def _map_kernel_k1(x_ref, wt_ref, b_ref, o_ref):
    # Whole reduction in one block: no accumulator scratch, single store.
    acc = jnp.dot(x_ref[...].astype(jnp.bfloat16), wt_ref[...],
                  preferred_element_type=jnp.float32)
    o_ref[...] = jnp.maximum(acc + b_ref[...], 0.0).astype(o_ref.dtype)


def _map_kernel_kt_inplace(x_ref, wt_ref, b_ref, o_ref):
    # K tiled, f32 output: accumulate directly into the resident output block
    # (its block index is constant over k) — no scratch, no acc->out copy.
    k = pl.program_id(2)
    prod = jnp.dot(x_ref[...].astype(jnp.bfloat16), wt_ref[...],
                   preferred_element_type=jnp.float32)

    @pl.when(k == 0)
    def _():
        o_ref[...] = prod

    @pl.when(k != 0)
    def _():
        o_ref[...] += prod

    @pl.when(k == pl.num_programs(2) - 1)
    def _():
        o_ref[...] = jnp.maximum(o_ref[...] + b_ref[...], 0.0)


def _map_kernel_kt_scratch(x_ref, wt_ref, b_ref, o_ref, acc_ref):
    # K tiled, non-f32 output: keep an f32 accumulator in VMEM scratch.
    k = pl.program_id(2)

    @pl.when(k == 0)
    def _():
        acc_ref[...] = jnp.zeros_like(acc_ref)

    acc_ref[...] += jnp.dot(x_ref[...].astype(jnp.bfloat16), wt_ref[...],
                            preferred_element_type=jnp.float32)

    @pl.when(k == pl.num_programs(2) - 1)
    def _():
        o_ref[...] = jnp.maximum(acc_ref[...] + b_ref[...],
                                 0.0).astype(o_ref.dtype)


# ------------------------------- wrapper ------------------------------------

def llm_encoder_map(x, weight_t, bias2d, *, out_features=None,
                    out_dtype=jnp.float32):
    """Pallas implementation of LLMEncoder.map: relu(x @ W.T + b).

    x        : [N, H_in]            float32 (cast to bf16 inside the kernel)
    weight_t : [H_in_p, H_out_p]    bfloat16 (W transposed + padded at init)
    bias2d   : [1, H_out_p]         float32
    """
    out_dtype = jnp.dtype(out_dtype)
    out_bytes = out_dtype.itemsize
    n, h_in = x.shape
    h_in_p, h_out_p = weight_t.shape
    assert h_in <= h_in_p and bias2d.shape == (1, h_out_p)
    out_features = h_out_p if out_features is None else out_features

    # Pad x's feature dim (no-op when hidden is already lane aligned).
    if h_in != h_in_p:
        x = jnp.pad(x, ((0, 0), (0, h_in_p - h_in)))

    # Generation-aware VMEM budget: 96 MiB limit on v5e/v6e, 48 MiB on v7x.
    phys_vmem = _tpu_vmem_bytes()
    vmem_limit = int(phys_vmem * 3 // 4)
    budget = int(vmem_limit * 0.9)

    tm, tk, tn = _plan_tiles(n, h_in_p, h_out_p, out_bytes, budget)

    n_pad = _round_up(n, tm)
    if n_pad != n:
        x = jnp.pad(x, ((0, n_pad - n), (0, 0)))

    grid = (n_pad // tm, h_out_p // tn, h_in_p // tk)
    k_tiles = grid[2]

    if k_tiles == 1:
        kernel = _map_kernel_k1
        scratch = []
    elif out_dtype == jnp.dtype(jnp.float32):
        kernel = _map_kernel_kt_inplace
        scratch = []
    else:
        kernel = _map_kernel_kt_scratch
        scratch = [pltpu.VMEM((tm, tn), jnp.float32)]

    cost = pl.CostEstimate(
        flops=2 * n_pad * h_in_p * h_out_p,
        transcendentals=0,
        bytes_accessed=(n_pad * h_in_p * 4          # x (f32)
                        + h_in_p * h_out_p * 2      # W (bf16, fetched once)
                        + h_out_p * 4               # bias
                        + n_pad * h_out_p * out_bytes),
    )

    in_specs = [
        pl.BlockSpec((tm, tk), lambda i, j, k: (i, k)),
        pl.BlockSpec((tk, tn), lambda i, j, k: (k, j)),
        pl.BlockSpec((1, tn), lambda i, j, k: (0, j)),
    ]
    out_spec = pl.BlockSpec((tm, tn), lambda i, j, k: (i, j))

    use_core_parallel = _is_v7x() and grid[0] >= 2

    def _run(dim_sems):
        return pl.pallas_call(
            kernel,
            out_shape=jax.ShapeDtypeStruct((n_pad, h_out_p), out_dtype),
            grid_spec=pltpu.PrefetchScalarGridSpec(
                num_scalar_prefetch=0,
                grid=grid,
                in_specs=in_specs,
                out_specs=out_spec,
                scratch_shapes=scratch,
            ),
            compiler_params=pltpu.CompilerParams(
                dimension_semantics=dim_sems,
                vmem_limit_bytes=vmem_limit,
            ),
            cost_estimate=cost,
        )(x, weight_t, bias2d)

    if use_core_parallel:
        # Shard the row tiles across v7x's two TensorCores; fall back to the
        # portable semantics if this generation/runtime rejects it.
        try:
            out = _run((pltpu.CORE_PARALLEL, pltpu.PARALLEL, pltpu.ARBITRARY))
        except Exception:
            out = _run((pltpu.PARALLEL, pltpu.PARALLEL, pltpu.ARBITRARY))
    else:
        out = _run((pltpu.PARALLEL, pltpu.PARALLEL, pltpu.ARBITRARY))

    if n_pad != n or h_out_p != out_features:
        out = out[:n, :out_features]
    return out


# ----------------------------- Encoder wrapper ------------------------------

class LLMEncoderPallas:
    """Deterministically-initialized JAX/Pallas port of LLMEncoder."""

    def __init__(self, num_users, num_items, hidden_size,
                 initializer_range=0.02, out_dtype=jnp.float32,
                 key=jax.random.PRNGKey(0)):
        k_user, k_item, k_w, k_b = jax.random.split(key, 4)
        self.hidden_size = hidden_size
        self.out_dtype = jnp.dtype(out_dtype)

        # user_embeddings.weight.data.normal_(mean=0, std=initializer_range)
        self.user_embeddings = (
            jax.random.normal(k_user, (num_users, hidden_size), jnp.float32)
            * initializer_range)
        # item_embeddings keep default nn.Embedding init ~ N(0, 1)
        self.item_embeddings = jax.random.normal(
            k_item, (num_items, hidden_size), jnp.float32)

        # nn.Linear(hidden, hidden): weight [out, in], bias [out]
        bound = 1.0 / (hidden_size ** 0.5)
        w = jax.random.uniform(k_w, (hidden_size, hidden_size), jnp.float32,
                               -bound, bound)
        b = jax.random.uniform(k_b, (hidden_size,), jnp.float32, -bound, bound)

        # One-time layout prep (hot path never re-does this):
        #   transpose -> [H_in, H_out], pad to multiples of 128, cast to bf16.
        h_pad = _round_up(hidden_size, 128)
        wt = w.T
        if h_pad != hidden_size:
            pad = h_pad - hidden_size
            wt = jnp.pad(wt, ((0, pad), (0, pad)))
        self.mapper_wt = wt.astype(jnp.bfloat16)           # [H_in_p, H_out_p]
        self.mapper_b = b                                   # [H] f32 (reference)
        b_pad = b if h_pad == hidden_size else jnp.pad(b, (0, h_pad - hidden_size))
        self._mapper_b2d = b_pad.astype(jnp.float32).reshape(1, h_pad)
        self._h_pad = h_pad

    def map(self, input_emb):
        # input_emb: [..., H] -> relu(linear(input_emb))
        lead = input_emb.shape[:-1]
        x2d = input_emb.reshape(-1, self.hidden_size)
        out = llm_encoder_map(x2d, self.mapper_wt, self._mapper_b2d,
                              out_features=self.hidden_size,
                              out_dtype=self.out_dtype)
        return out.reshape(*lead, self.hidden_size)

    def embed_items(self, item_ids):
        # TODO(synk): the gather could be fused into llm_encoder_map (scalar-
        # prefetched ids + manual row-gather DMA) to skip the [N,H] HBM
        # round-trip; kept as jnp.take glue for robustness.
        return jnp.take(self.item_embeddings, item_ids, axis=0)

    def embed_users(self, user_ids):
        return jnp.take(self.user_embeddings, user_ids, axis=0)

    def forward(self, input_ids=None, **kwargs):
        # TODO(synk): delegates to the external HF Llama model in PyTorch;
        # not reimplemented here.
        raise NotImplementedError("forward() wraps an external LLM")


# --------------------------------- main --------------------------------------

if __name__ == "__main__":
    key = jax.random.PRNGKey(0)
    num_users, num_items, hidden = 64, 128, 128
    batch, seq = 2, 8

    enc = LLMEncoderPallas(num_users, num_items, hidden, key=key)

    k_ids, _ = jax.random.split(jax.random.PRNGKey(0))
    item_ids = jax.random.randint(k_ids, (batch, seq), 0, num_items)

    # LLMEncoder.map hot path: embedding lookup -> Linear -> ReLU
    input_emb = enc.embed_items(item_ids)              # [B, S, H]
    out = enc.map(input_emb)                           # [B, S, H]
    out = jax.block_until_ready(out)

    # Reference in plain JAX with the same bf16-input / f32-accumulate recipe.
    x2d = input_emb.reshape(-1, hidden)
    wt_logical = enc.mapper_wt[:hidden, :hidden]       # bf16 weight slab
    ref = jnp.maximum(
        jnp.dot(x2d.astype(jnp.bfloat16), wt_logical,
                preferred_element_type=jnp.float32) + enc.mapper_b,
        0.0,
    ).reshape(batch, seq, hidden)

    assert out.shape == (batch, seq, hidden)
    assert out.dtype == jnp.float32
    assert jnp.allclose(out, ref, atol=1e-3, rtol=1e-3), (
        float(jnp.max(jnp.abs(out - ref))))

    print("KERNEL_OK")
</pallas_src>

<mosaic_0001>
module attributes {stable_mosaic.version = 11 : i64} {
  func.func @_map_kernel_k1(%arg0: i32, %arg1: i32, %arg2: i32, %arg3: memref<16x128xf32, #tpu.memory_space<vmem>>, %arg4: memref<128x128xbf16, #tpu.memory_space<vmem>>, %arg5: memref<1x128xf32, #tpu.memory_space<vmem>>, %arg6: memref<16x128xf32, #tpu.memory_space<vmem>>) attributes {dimension_semantics = [#tpu.dimension_semantics<parallel>, #tpu.dimension_semantics<parallel>, #tpu.dimension_semantics<arbitrary>], iteration_bounds = array<i64: 1, 1, 1>, scalar_prefetch = 0 : i64, scratch_operands = 0 : i64, tpu.core_type = #tpu.core_type<tc>, window_params = [{transform_indices = @transform_0, window_bounds = array<i64: 16, 128>}, {transform_indices = @transform_1, window_bounds = array<i64: 128, 128>}, {transform_indices = @transform_2, window_bounds = array<i64: 1, 128>}, {transform_indices = @transform_3, window_bounds = array<i64: 16, 128>}]} {
    %c0 = arith.constant 0 : index
    %c0_0 = arith.constant 0 : index
    %0 = vector.load %arg3[%c0, %c0_0] : memref<16x128xf32, #tpu.memory_space<vmem>>, vector<16x128xf32>
    %1 = arith.truncf %0 : vector<16x128xf32> to vector<16x128xbf16>
    %c0_1 = arith.constant 0 : index
    %c0_2 = arith.constant 0 : index
    %2 = vector.load %arg4[%c0_1, %c0_2] : memref<128x128xbf16, #tpu.memory_space<vmem>>, vector<128x128xbf16>
    %cst = arith.constant dense<0.000000e+00> : vector<16x128xf32>
    %3 = tpu.matmul %1, %2, %cst {dimension_numbers = #tpu.dot_dimension_numbers<[1], [0], [0], [1], [0, 0, 1, 1], [], []>} : vector<16x128xbf16>, vector<128x128xbf16>, vector<16x128xf32> -> vector<16x128xf32>
    %c0_3 = arith.constant 0 : index
    %c0_4 = arith.constant 0 : index
    %4 = vector.load %arg5[%c0_3, %c0_4] : memref<1x128xf32, #tpu.memory_space<vmem>>, vector<1x128xf32>
    %5 = vector.broadcast %4 : vector<1x128xf32> to vector<16x128xf32>
    %6 = arith.addf %3, %5 : vector<16x128xf32>
    %cst_5 = arith.constant 0.000000e+00 : f32
    %7 = vector.broadcast %cst_5 : f32 to vector<16x128xf32>
    %8 = arith.maximumf %6, %7 : vector<16x128xf32>
    %c0_6 = arith.constant 0 : index
    %c0_7 = arith.constant 0 : index
    %9 = vector.load %arg6[%c0_6, %c0_7] : memref<16x128xf32, #tpu.memory_space<vmem>>, vector<16x128xf32>
    tpu.vector_store %arg6[%c0_6, %c0_7], %8 {strides = array<i32>} : memref<16x128xf32, #tpu.memory_space<vmem>>, vector<16x128xf32>,
    return
  }
  func.func @transform_0(%arg0: i32, %arg1: i32, %arg2: i32) -> (i32, i32) {
    %c0_i32 = arith.constant 0 : i32
    return %arg0, %arg2 : i32, i32
  }
  func.func @transform_1(%arg0: i32, %arg1: i32, %arg2: i32) -> (i32, i32) {
    %c0_i32 = arith.constant 0 : i32
    return %arg2, %arg1 : i32, i32
  }
  func.func @transform_2(%arg0: i32, %arg1: i32, %arg2: i32) -> (i32, i32) {
    %c0_i32 = arith.constant 0 : i32
    %c0_i32_0 = arith.constant 0 : i32
    return %c0_i32, %arg1 : i32, i32
  }
  func.func @transform_3(%arg0: i32, %arg1: i32, %arg2: i32) -> (i32, i32) {
    %c0_i32 = arith.constant 0 : i32
    return %arg0, %arg1 : i32, i32
  }
}

</mosaic_0001>

<llo_original>
// kernel: tpu_custom_call.1
$region0: #{tpu_custom_call.1}
  #allocation0 [shape = 'u32[]', space=smem, size = 0x4, offset = 0x4, fixed_abs, tag = 'smem constant byte address 0x4 - core index']
  #allocation1 [shape = 'u32[144,128]{1,0:T(1,128)}', space=vmem, size = 0x12000, scoped, tag = 'internal scratch']
  %s0 = inlined_call_operand.hbm [shape: f32[16,128], index: 0, kind: input, shape index: {}]
  %s1 = inlined_call_operand.hbm [shape: bf16[128,128], index: 1, kind: input, shape index: {}]
  %s2 = inlined_call_operand.vmem [shape: f32[1,128], index: 2, kind: input, shape index: {}]
  %s3 = inlined_call_operand.hbm [shape: f32[16,128], index: 3, kind: output, shape index: {}]
  %s4 = sld [smem:[#allocation0]]
  $region30: #{tpu_custom_call.1} parent=0
    _
  %s6 = ssub.s32 1, %s4
  %s7 = scalar_select 0, %s6, %s4
  $region1: #{tpu_custom_call.1} parent=0
    #allocation2 [shape = 'u8[8192]{0}', space=vmem, size = 0x2000, scoped, tag = 'input window, operand 0, single buffered']
    #allocation3 [shape = 's32[1]{0}', space=sflag, size = 0x4, scoped, tag = 'scoped memory for tpu_custom_call.1']
    #allocation4 [shape = 's32[1]{0}', space=sflag, size = 0x4, scoped, tag = 'scoped memory for tpu_custom_call.1']
    #allocation5 [shape = 'u8[32768]{0}', space=vmem, size = 0x8000, scoped, tag = 'input window, operand 1, single buffered']
    #allocation6 [shape = 's32[1]{0}', space=sflag, size = 0x4, scoped, tag = 'scoped memory for tpu_custom_call.1']
    #allocation7 [shape = 'u8[8192]{0}', space=vmem, size = 0x2000, scoped, tag = 'output window, operand 0, single buffered']
    %8 = vsyncpa [#allocation3], 0
    %9 = vsyncpa [#allocation6], 0
    %10 = vsyncpa [#allocation4], 0
    // Predicated region
    $region2: #{tpu_custom_call.1} parent=1 // pred_check
      _
    $region3: #{tpu_custom_call.1} parent=1 // pred_check_branch
      %12 = sbr.rel (0) target = $region5
    $region4: #{tpu_custom_call.1} parent=1 // pred_region
      %s14 = ssub.s32 256, 256
      %15 = vsyncadd [#allocation3], %s14
      %s16 = sshll.u32 [#allocation2], 4
      %s17 = int_to_ptr.vmem [resolvable:$true] %s16
      %22 = dma.hbm_to_vmem [thread:$0]  %s0, 256, %s17, [#allocation3], 128, 128, 8
    $region5: #{tpu_custom_call.1} parent=1 // pred_fallthru
      _
    // Predicated region
    $region6: #{tpu_custom_call.1} parent=1 // pred_check
      _
    $region7: #{tpu_custom_call.1} parent=1 // pred_check_branch
      %24 = sbr.rel (0) target = $region9
    $region8: #{tpu_custom_call.1} parent=1 // pred_region
      %s26 = ssub.s32 1024, 1024
      %27 = vsyncadd [#allocation6], %s26
      %s28 = sshll.u32 [#allocation5], 4
      %s29 = int_to_ptr.vmem [resolvable:$true] %s28
      %34 = dma.hbm_to_vmem [thread:$0]  %s1, 1024, %s29, [#allocation6], 64, 64, 4
    $region9: #{tpu_custom_call.1} parent=1 // pred_fallthru
      _
    // Predicated region
    $region10: #{tpu_custom_call.1} parent=1 // pred_check
      _
    $region11: #{tpu_custom_call.1} parent=1 // pred_check_branch
      %36 = sbr.rel (0) target = $region13
    $region12: #{tpu_custom_call.1} parent=1 // pred_region
      _
    $region13: #{tpu_custom_call.1} parent=1 // pred_fallthru
      _
    // Predicated region
    $region14: #{tpu_custom_call.1} parent=1 // pred_check
      _
    $region15: #{tpu_custom_call.1} parent=1 // pred_check_branch
      %38 = sbr.rel (0) target = $region17
    $region16: #{tpu_custom_call.1} parent=1 // pred_region
      %39 = dma.done [#allocation3], 256
    $region17: #{tpu_custom_call.1} parent=1 // pred_fallthru
      _
    // Predicated region
    $region18: #{tpu_custom_call.1} parent=1 // pred_check
      _
    $region19: #{tpu_custom_call.1} parent=1 // pred_check_branch
      %41 = sbr.rel (0) target = $region21
    $region20: #{tpu_custom_call.1} parent=1 // pred_region
      %42 = dma.done [#allocation6], 1024
    $region21: #{tpu_custom_call.1} parent=1 // pred_fallthru
      _
    %v44 = vld [vmem:[#allocation2] sm:$0xff]
    %v45 = vld [vmem:[#allocation2 + $0x8] sm:$0xff]
    %v46 = vpack.c.bf16 %v45, %v44
    %v47 = vld [vmem:[#allocation5] sm:$0xf]
    %v48 = vld [vmem:[#allocation5 + $0x4] sm:$0xf]
    %v49 = vld [vmem:[#allocation5 + $0x8] sm:$0xf]
    %v50 = vld [vmem:[#allocation5 + $0xc] sm:$0xf]
    %v51 = vld [vmem:[#allocation5 + $0x10] sm:$0xf]
    %v52 = vld [vmem:[#allocation5 + $0x14] sm:$0xf]
    %v53 = vld [vmem:[#allocation5 + $0x18] sm:$0xf]
    %v54 = vld [vmem:[#allocation5 + $0x1c] sm:$0xf]
    %v55 = vld [vmem:[#allocation5 + $0x20] sm:$0xf]
    %v56 = vld [vmem:[#allocation5 + $0x24] sm:$0xf]
    %v57 = vld [vmem:[#allocation5 + $0x28] sm:$0xf]
    %v58 = vld [vmem:[#allocation5 + $0x2c] sm:$0xf]
    %v59 = vld [vmem:[#allocation5 + $0x30] sm:$0xf]
    %v60 = vld [vmem:[#allocation5 + $0x34] sm:$0xf]
    %v61 = vld [vmem:[#allocation5 + $0x38] sm:$0xf]
    %v62 = vld [vmem:[#allocation5 + $0x3c] sm:$0xf]
    %v63 = vld [vmem:[%s2] sm:$0x1]
    %v65 = vlaneseq
    %v66 = vshrl.u32 %v65, 7
    %v67 = vsub.s32 0, %v66
    %v68 = vrot.slane %v63, %v67
    %v86 = vunpack.c.l.b16 %v47
    %v87 = vunpack.c.l.b16 %v48
    %v88 = vunpack.c.l.b16 %v49
    %v89 = vunpack.c.l.b16 %v50
    %v90 = vunpack.c.l.b16 %v51
    %v91 = vunpack.c.l.b16 %v52
    %v92 = vunpack.c.l.b16 %v53
    %v93 = vunpack.c.l.b16 %v54
    %v94 = vunpack.c.l.b16 %v55
    %v95 = vunpack.c.l.b16 %v56
    %v96 = vunpack.c.l.b16 %v57
    %v97 = vunpack.c.l.b16 %v58
    %v98 = vunpack.c.l.b16 %v59
    %v99 = vunpack.c.l.b16 %v60
    %v100 = vunpack.c.l.b16 %v61
    %v101 = vunpack.c.l.b16 %v62
    %v102 = vpack.c.b16 %v87, %v86
    %v103 = vpack.c.b16 %v89, %v88
    %v104 = vpack.c.b16 %v91, %v90
    %v105 = vpack.c.b16 %v93, %v92
    %v106 = vpack.c.b16 %v95, %v94
    %v107 = vpack.c.b16 %v97, %v96
    %v108 = vpack.c.b16 %v99, %v98
    %v109 = vpack.c.b16 %v101, %v100
    %118 = vmatprep.subr.bf16.mxu0 0
    %119 = vmatpush1.bf16.msra.mxu0 %v109
    %120 = vmatprep.subr.bf16.mxu0 0
    %121 = vmatpush1.bf16.msra.mxu0 %v108
    %122 = vmatprep.subr.bf16.mxu0 0
    %123 = vmatpush1.bf16.msra.mxu0 %v107
    %124 = vmatprep.subr.bf16.mxu0 0
    %125 = vmatpush1.bf16.msra.mxu0 %v106
    %126 = vmatprep.subr.bf16.mxu0 0
    %127 = vmatpush1.bf16.msra.mxu0 %v105
    %128 = vmatprep.subr.bf16.mxu0 0
    %129 = vmatpush1.bf16.msra.mxu0 %v104
    %130 = vmatprep.subr.bf16.mxu0 0
    %131 = vmatpush1.bf16.msra.mxu0 %v103
    %132 = vmatprep.subr.bf16.mxu0 0
    %133 = vmatpush1.bf16.msra.mxu0 %v102
    %134 = vmatprep.subr.bf16.mxu0 0
    %135 = vmatpush2.bf16.msra.mxu0 0
    %136 = vmatprep.subr.bf16.mxu0 0
    %137 = vmatpush2.bf16.msra.mxu0 0
    %138 = vmatprep.subr.bf16.mxu0 0
    %139 = vmatpush2.bf16.msra.mxu0 0
    %140 = vmatprep.subr.bf16.mxu0 0
    %141 = vmatpush2.bf16.msra.mxu0 0
    %142 = vmatprep.subr.bf16.mxu0 0
    %143 = vmatpush2.bf16.msra.mxu0 0
    %144 = vmatprep.subr.bf16.mxu0 0
    %145 = vmatpush2.bf16.msra.mxu0 0
    %146 = vmatprep.subr.bf16.mxu0 0
    %147 = vmatpush2.bf16.msra.mxu0 0
    %148 = vmatprep.subr.bf16.mxu0 0
    %149 = vmatpush2.bf16.msra.mxu0 0
    %150 = vmatprep.mubr.bf16.mxu0 0
    %151 = vmatmul.mubr.bf16.gmra.mxu0 %v46
    %v152 = vpop.f32.mrf.mxu0
    %v153 = vadd.f32 %v68, %v152
    %v154 = vpop.f32.mrf.mxu0
    %v155 = vpop.f32.mrf.mxu0
    %v156 = vadd.f32 %v68, %v155
    %v157 = vpop.f32.mrf.mxu0
    %158 = vdwg.mxu0
    %v159 = vmax.f32 %v153, 0.0
    %v160 = vmax.f32 %v156, 0.0
    %161 = vst [vmem:[#allocation7] sm:$0xff] %v159
    %162 = vst [vmem:[#allocation7 + $0x8] sm:$0xff] %v160
    // Predicated region
    $region22: #{tpu_custom_call.1} parent=1 // pred_check
      _
    $region23: #{tpu_custom_call.1} parent=1 // pred_check_branch
      %164 = sbr.rel (0) target = $region25
    $region24: #{tpu_custom_call.1} parent=1 // pred_region
      %s166 = ssub.s32 256, 256
      %167 = vsyncadd [#allocation4], %s166
      %s168 = sshll.u32 [#allocation7], 4
      %s169 = int_to_ptr.vmem [resolvable:$true] %s168
      %174 = dma.vmem_to_hbm [thread:$0]  %s169, 256, %s3, [#allocation4], 128, 128, 8
    $region25: #{tpu_custom_call.1} parent=1 // pred_fallthru
      _
    // Predicated region
    $region26: #{tpu_custom_call.1} parent=1 // pred_check
      _
    $region27: #{tpu_custom_call.1} parent=1 // pred_check_branch
      %176 = sbr.rel (0) target = $region29
    $region28: #{tpu_custom_call.1} parent=1 // pred_region
      %177 = dma.done [#allocation4], 256
    $region29: #{tpu_custom_call.1} parent=1 // pred_fallthru
      _
    %178 = vsyncpa [#allocation3], 1
    %179 = vsyncpa [#allocation6], 1
    %180 = vsyncpa [#allocation4], 1

</llo_original>
